<compile_context>
chip_gen: v5e
topology: v5e:2x2
jax: 0.10.0
libtpu: 0.0.40
codegen_flags: <defaults>
</compile_context>

<pallas_src>
import functools

import jax
import jax.numpy as jnp
from jax.experimental import pallas as pl
from jax.experimental.pallas import tpu as pltpu

IN_FEATURES = 17
H1 = 64
H2 = 64
H3 = 64
OUT_FEATURES = 1

# Max lanes per grid step (multiple of 128). 8192 keeps the working set
# (~20 MiB incl. double buffers and f32 intermediates) safely inside scoped
# VMEM on every generation while amortizing per-step overhead.
TB_MAX = 8192


def mlp_kernel(xt_ref,
               w1_ref,
               w2_ref, b2_ref,
               w3_ref, b3_ref,
               w4t_ref, b4_ref,
               o_ref):
    act = xt_ref[...]                      # bf16 [18, TB]  (17 features + ones row)

    # Layer 1: bias is folded into the extra W1 column -> matmul + ReLU only.
    h = jnp.dot(w1_ref[...], act, preferred_element_type=jnp.float32)   # f32 [64, TB]
    h = jnp.maximum(h, 0.0).astype(jnp.bfloat16)

    # Layers 2-3: bf16 epilogue (single cast of the f32 accumulator, bf16 bias
    # add + ReLU) feeds the next matmul directly.
    h = jnp.dot(w2_ref[...], h, preferred_element_type=jnp.float32)
    h = jnp.maximum(h.astype(jnp.bfloat16) + b2_ref[...], 0)

    h = jnp.dot(w3_ref[...], h, preferred_element_type=jnp.float32)
    h = jnp.maximum(h.astype(jnp.bfloat16) + b3_ref[...], 0)

    # Layer 4 (out_features = 1): off the MXU. Broadcast-multiply on the VPU,
    # sublane-axis reduction on the XLU, accumulation kept in f32.
    out = jnp.sum(w4t_ref[...] * h, axis=0, keepdims=True) + b4_ref[...]  # f32 [1, TB]
    o_ref[...] = out.astype(o_ref.dtype)


@functools.partial(jax.jit, static_argnames=("tb_max",))
def simple_dnn_forward(x, params, *, tb_max=TB_MAX):
    """x: [B, 17] float32. params: PyTorch-layout weights (w [out, in], b [out])."""
    B = x.shape[0]

    # Tile selection: >=2 tiles (v7x megacore sharding), balanced tile sizes.
    n_tiles = max(2, -(-B // tb_max))                     # cdiv, floored at 2
    tb = ((-(-B // n_tiles) + 127) // 128) * 128          # round_up(cdiv, 128)
    b_pad = n_tiles * tb

    # --- weights (one-time wrapper transforms, all tiny) ---
    w1, b1 = params["lin1"]
    w2, b2 = params["lin2"]
    w3, b3 = params["lin3"]
    w4, b4 = params["lin4"]

    w1a = jnp.concatenate([w1, b1.reshape(-1, 1)], axis=1).astype(jnp.bfloat16)  # [64, 18]
    w2b = w2.astype(jnp.bfloat16)                                                # [64, 64]
    w3b = w3.astype(jnp.bfloat16)                                                # [64, 64]
    b2c = b2.reshape(-1, 1).astype(jnp.bfloat16)                                 # [64, 1]
    b3c = b3.reshape(-1, 1).astype(jnp.bfloat16)                                 # [64, 1]
    w4t = jnp.transpose(w4).astype(jnp.float32)                                  # [64, 1]
    b4c = b4.reshape(1, 1).astype(jnp.float32)                                   # [1, 1]

    # --- input: batch-on-lanes + ones row for the folded layer-1 bias ---
    xt = jnp.concatenate(
        [jnp.transpose(x).astype(jnp.bfloat16), jnp.ones((1, B), jnp.bfloat16)],
        axis=0)                                                                  # [18, B]
    xt = jnp.pad(xt, ((0, 0), (0, b_pad - B)))                                   # [18, b_pad]

    def resident(arr):  # full array, VMEM-resident across all grid steps
        return pl.BlockSpec(arr.shape, lambda i: (0, 0))

    # Scoped-VMEM budget sized to the actual buffers (floor at 32 MiB, which is
    # the known-good default on v6e/v7x and above v5e's 16 MiB default).
    vmem_est = int(1.5 * (2 * 32 * tb * 2        # double-buffered bf16 x tiles (18->32 rows)
                          + 2 * 8 * tb * 4       # double-buffered f32 out tiles (1->8 rows)
                          + 6 * 64 * tb * 4)     # live [64, tb] intermediates (generous)
                   ) + (2 << 20)                 # resident weights + slack
    vmem_limit = max(32 << 20, min(48 << 20, vmem_est))

    flops = 2 * b_pad * ((IN_FEATURES + 1) * H1 + H1 * H2 + H2 * H3 + H3 * OUT_FEATURES)
    weight_bytes = (int(w1a.size) + int(w2b.size) + int(w3b.size)
                    + int(b2c.size) + int(b3c.size)) * 2 \
                   + (int(w4t.size) + int(b4c.size)) * 4
    bytes_accessed = int(xt.size) * 2 + b_pad * OUT_FEATURES * 4 + weight_bytes

    out_t = pl.pallas_call(
        mlp_kernel,
        out_shape=jax.ShapeDtypeStruct((OUT_FEATURES, b_pad), jnp.float32),
        grid=(n_tiles,),
        in_specs=[
            pl.BlockSpec((IN_FEATURES + 1, tb), lambda i: (0, i)),
            resident(w1a),
            resident(w2b), resident(b2c),
            resident(w3b), resident(b3c),
            resident(w4t), resident(b4c),
        ],
        out_specs=pl.BlockSpec((OUT_FEATURES, tb), lambda i: (0, i)),
        compiler_params=pltpu.CompilerParams(
            dimension_semantics=("parallel",),
            vmem_limit_bytes=vmem_limit),
        cost_estimate=pl.CostEstimate(
            flops=flops, transcendentals=0, bytes_accessed=bytes_accessed),
    )(xt, w1a, w2b, b2c, w3b, b3c, w4t, b4c)

    return jnp.transpose(out_t[:, :B])                   # [B, 1] float32


def init_params(key):
    """PyTorch nn.Linear-style init: w [out, in], b [out], uniform(+/-1/sqrt(fan_in))."""
    layer_dims = [
        ("lin1", IN_FEATURES, H1),
        ("lin2", H1, H2),
        ("lin3", H2, H3),
        ("lin4", H3, OUT_FEATURES),
    ]
    params = {}
    for name, fan_in, fan_out in layer_dims:
        key, kw, kb = jax.random.split(key, 3)
        bound = 1.0 / (fan_in ** 0.5)
        w = jax.random.uniform(kw, (fan_out, fan_in), jnp.float32, -bound, bound)
        b = jax.random.uniform(kb, (fan_out,), jnp.float32, -bound, bound)
        params[name] = (w, b)
    return params


def reference_forward(x, params):
    h = x
    for name in ("lin1", "lin2", "lin3"):
        w, b = params[name]
        h = jnp.maximum(h @ w.T + b, 0.0)
    w, b = params["lin4"]
    return h @ w.T + b


if __name__ == "__main__":
    key = jax.random.PRNGKey(0)
    key, kx = jax.random.split(key)

    B = 8
    x = jax.random.normal(kx, (B, IN_FEATURES), jnp.float32)
    params = init_params(key)

    out = simple_dnn_forward(x, params)
    out = jax.block_until_ready(out)

    ref = reference_forward(x, params)
    assert out.shape == (B, OUT_FEATURES), out.shape
    # Kernel uses bf16 matmul operands / bf16 epilogues (f32 accumulation) -> loose
    # tolerance vs the f32 reference.
    assert jnp.allclose(out, ref, atol=5e-2, rtol=5e-2), (out, ref)

    print("KERNEL_OK")
</pallas_src>

<mosaic_0001>
module attributes {stable_mosaic.version = 11 : i64} {
  func.func @mlp_kernel(%arg0: i32, %arg1: memref<18x128xbf16, #tpu.memory_space<vmem>>, %arg2: memref<64x18xbf16, #tpu.memory_space<vmem>>, %arg3: memref<64x64xbf16, #tpu.memory_space<vmem>>, %arg4: memref<64x1xbf16, #tpu.memory_space<vmem>>, %arg5: memref<64x64xbf16, #tpu.memory_space<vmem>>, %arg6: memref<64x1xbf16, #tpu.memory_space<vmem>>, %arg7: memref<64x1xf32, #tpu.memory_space<vmem>>, %arg8: memref<1x1xf32, #tpu.memory_space<vmem>>, %arg9: memref<1x128xf32, #tpu.memory_space<vmem>>) attributes {dimension_semantics = [#tpu.dimension_semantics<parallel>], iteration_bounds = array<i64: 2>, scalar_prefetch = 0 : i64, scratch_operands = 0 : i64, tpu.core_type = #tpu.core_type<tc>, window_params = [{transform_indices = @transform_0, window_bounds = array<i64: 18, 128>}, {pipeline_mode = #tpu.pipeline_mode<synchronous>, transform_indices = @transform_1, window_bounds = array<i64: 64, 18>}, {pipeline_mode = #tpu.pipeline_mode<synchronous>, transform_indices = @transform_2, window_bounds = array<i64: 64, 64>}, {pipeline_mode = #tpu.pipeline_mode<synchronous>, transform_indices = @transform_3, window_bounds = array<i64: 64, 1>}, {pipeline_mode = #tpu.pipeline_mode<synchronous>, transform_indices = @transform_4, window_bounds = array<i64: 64, 64>}, {pipeline_mode = #tpu.pipeline_mode<synchronous>, transform_indices = @transform_5, window_bounds = array<i64: 64, 1>}, {pipeline_mode = #tpu.pipeline_mode<synchronous>, transform_indices = @transform_6, window_bounds = array<i64: 64, 1>}, {pipeline_mode = #tpu.pipeline_mode<synchronous>, transform_indices = @transform_7, window_bounds = array<i64: 1, 1>}, {transform_indices = @transform_8, window_bounds = array<i64: 1, 128>}]} {
    %c0 = arith.constant 0 : index
    %c0_0 = arith.constant 0 : index
    %0 = vector.load %arg1[%c0, %c0_0] : memref<18x128xbf16, #tpu.memory_space<vmem>>, vector<18x128xbf16>
    %c0_1 = arith.constant 0 : index
    %c0_2 = arith.constant 0 : index
    %1 = vector.load %arg2[%c0_1, %c0_2] : memref<64x18xbf16, #tpu.memory_space<vmem>>, vector<64x18xbf16>
    %cst = arith.constant dense<0.000000e+00> : vector<64x128xf32>
    %2 = tpu.matmul %1, %0, %cst {dimension_numbers = #tpu.dot_dimension_numbers<[1], [0], [0], [1], [0, 0, 1, 1], [], []>} : vector<64x18xbf16>, vector<18x128xbf16>, vector<64x128xf32> -> vector<64x128xf32>
    %cst_3 = arith.constant 0.000000e+00 : f32
    %3 = vector.broadcast %cst_3 : f32 to vector<64x128xf32>
    %4 = arith.maximumf %2, %3 : vector<64x128xf32>
    %5 = arith.truncf %4 : vector<64x128xf32> to vector<64x128xbf16>
    %c0_4 = arith.constant 0 : index
    %c0_5 = arith.constant 0 : index
    %6 = vector.load %arg3[%c0_4, %c0_5] : memref<64x64xbf16, #tpu.memory_space<vmem>>, vector<64x64xbf16>
    %cst_6 = arith.constant dense<0.000000e+00> : vector<64x128xf32>
    %7 = tpu.matmul %6, %5, %cst_6 {dimension_numbers = #tpu.dot_dimension_numbers<[1], [0], [0], [1], [0, 0, 1, 1], [], []>} : vector<64x64xbf16>, vector<64x128xbf16>, vector<64x128xf32> -> vector<64x128xf32>
    %8 = arith.truncf %7 : vector<64x128xf32> to vector<64x128xbf16>
    %c0_7 = arith.constant 0 : index
    %c0_8 = arith.constant 0 : index
    %9 = vector.load %arg4[%c0_7, %c0_8] : memref<64x1xbf16, #tpu.memory_space<vmem>>, vector<64x1xbf16>
    %10 = vector.broadcast %9 : vector<64x1xbf16> to vector<64x128xbf16>
    %11 = arith.addf %8, %10 : vector<64x128xbf16>
    %cst_9 = arith.constant 0.000000e+00 : bf16
    %12 = vector.broadcast %cst_9 : bf16 to vector<64x128xbf16>
    %13 = arith.maximumf %11, %12 : vector<64x128xbf16>
    %c0_10 = arith.constant 0 : index
    %c0_11 = arith.constant 0 : index
    %14 = vector.load %arg5[%c0_10, %c0_11] : memref<64x64xbf16, #tpu.memory_space<vmem>>, vector<64x64xbf16>
    %cst_12 = arith.constant dense<0.000000e+00> : vector<64x128xf32>
    %15 = tpu.matmul %14, %13, %cst_12 {dimension_numbers = #tpu.dot_dimension_numbers<[1], [0], [0], [1], [0, 0, 1, 1], [], []>} : vector<64x64xbf16>, vector<64x128xbf16>, vector<64x128xf32> -> vector<64x128xf32>
    %16 = arith.truncf %15 : vector<64x128xf32> to vector<64x128xbf16>
    %c0_13 = arith.constant 0 : index
    %c0_14 = arith.constant 0 : index
    %17 = vector.load %arg6[%c0_13, %c0_14] : memref<64x1xbf16, #tpu.memory_space<vmem>>, vector<64x1xbf16>
    %18 = vector.broadcast %17 : vector<64x1xbf16> to vector<64x128xbf16>
    %19 = arith.addf %16, %18 : vector<64x128xbf16>
    %cst_15 = arith.constant 0.000000e+00 : bf16
    %20 = vector.broadcast %cst_15 : bf16 to vector<64x128xbf16>
    %21 = arith.maximumf %19, %20 : vector<64x128xbf16>
    %c0_16 = arith.constant 0 : index
    %c0_17 = arith.constant 0 : index
    %22 = vector.load %arg7[%c0_16, %c0_17] : memref<64x1xf32, #tpu.memory_space<vmem>>, vector<64x1xf32>
    %23 = arith.extf %21 : vector<64x128xbf16> to vector<64x128xf32>
    %24 = vector.broadcast %22 : vector<64x1xf32> to vector<64x128xf32>
    %25 = arith.mulf %24, %23 : vector<64x128xf32>
    %cst_18 = arith.constant dense<0.000000e+00> : vector<128xf32>
    %26 = vector.multi_reduction <add>, %25, %cst_18 [0] : vector<64x128xf32> to vector<128xf32>
    %27 = vector.shape_cast %26 : vector<128xf32> to vector<1x128xf32>
    %c0_19 = arith.constant 0 : index
    %c0_20 = arith.constant 0 : index
    %28 = vector.load %arg8[%c0_19, %c0_20] : memref<1x1xf32, #tpu.memory_space<vmem>>, vector<1x1xf32>
    %29 = vector.broadcast %28 : vector<1x1xf32> to vector<1x128xf32>
    %30 = arith.addf %27, %29 : vector<1x128xf32>
    %c0_21 = arith.constant 0 : index
    %c0_22 = arith.constant 0 : index
    %31 = vector.load %arg9[%c0_21, %c0_22] : memref<1x128xf32, #tpu.memory_space<vmem>>, vector<1x128xf32>
    tpu.vector_store %arg9[%c0_21, %c0_22], %30 {strides = array<i32>} : memref<1x128xf32, #tpu.memory_space<vmem>>, vector<1x128xf32>,
    return
  }
  func.func @transform_0(%arg0: i32) -> (i32, i32) {
    %c0_i32 = arith.constant 0 : i32
    %c0_i32_0 = arith.constant 0 : i32
    return %c0_i32, %arg0 : i32, i32
  }
  func.func @transform_1(%arg0: i32) -> (i32, i32) {
    %c0_i32 = arith.constant 0 : i32
    %c0_i32_0 = arith.constant 0 : i32
    %c0_i32_1 = arith.constant 0 : i32
    return %c0_i32, %c0_i32_0 : i32, i32
  }
  func.func @transform_2(%arg0: i32) -> (i32, i32) {
    %c0_i32 = arith.constant 0 : i32
    %c0_i32_0 = arith.constant 0 : i32
    %c0_i32_1 = arith.constant 0 : i32
    return %c0_i32, %c0_i32_0 : i32, i32
  }
  func.func @transform_3(%arg0: i32) -> (i32, i32) {
    %c0_i32 = arith.constant 0 : i32
    %c0_i32_0 = arith.constant 0 : i32
    %c0_i32_1 = arith.constant 0 : i32
    return %c0_i32, %c0_i32_0 : i32, i32
  }
  func.func @transform_4(%arg0: i32) -> (i32, i32) {
    %c0_i32 = arith.constant 0 : i32
    %c0_i32_0 = arith.constant 0 : i32
    %c0_i32_1 = arith.constant 0 : i32
    return %c0_i32, %c0_i32_0 : i32, i32
  }
  func.func @transform_5(%arg0: i32) -> (i32, i32) {
    %c0_i32 = arith.constant 0 : i32
    %c0_i32_0 = arith.constant 0 : i32
    %c0_i32_1 = arith.constant 0 : i32
    return %c0_i32, %c0_i32_0 : i32, i32
  }
  func.func @transform_6(%arg0: i32) -> (i32, i32) {
    %c0_i32 = arith.constant 0 : i32
    %c0_i32_0 = arith.constant 0 : i32
    %c0_i32_1 = arith.constant 0 : i32
    return %c0_i32, %c0_i32_0 : i32, i32
  }
  func.func @transform_7(%arg0: i32) -> (i32, i32) {
    %c0_i32 = arith.constant 0 : i32
    %c0_i32_0 = arith.constant 0 : i32
    %c0_i32_1 = arith.constant 0 : i32
    return %c0_i32, %c0_i32_0 : i32, i32
  }
  func.func @transform_8(%arg0: i32) -> (i32, i32) {
    %c0_i32 = arith.constant 0 : i32
    %c0_i32_0 = arith.constant 0 : i32
    return %c0_i32, %arg0 : i32, i32
  }
}

</mosaic_0001>

<llo_original>
// kernel: simple_dnn_forward.1
$region0: #{simple_dnn_forward.1}
  #allocation0 [shape = 'u32[]', space=smem, size = 0x4, offset = 0x4, fixed_abs, tag = 'smem constant byte address 0x4 - core index']
  #allocation1 [shape = 'u32[72,128]{1,0:T(1,128)}', space=vmem, size = 0x9000, scoped, tag = 'internal scratch']
  #allocation2 [shape = 'f32[1,1]{1,0:T(1,128)S(1)}', space=vmem, size = 0x200, scoped, tag = 'scoped memory for simple_dnn_forward.1']
  %s0 = inlined_call_operand.vmem [shape: bf16[18,256], index: 0, kind: input, shape index: {}]
  %s1 = inlined_call_operand.vmem [shape: bf16[64,18], index: 1, kind: input, shape index: {}]
  %s2 = inlined_call_operand.vmem [shape: bf16[64,64], index: 2, kind: input, shape index: {}]
  %s3 = inlined_call_operand.vmem [shape: bf16[64,1], index: 3, kind: input, shape index: {}]
  %s4 = inlined_call_operand.vmem [shape: bf16[64,64], index: 4, kind: input, shape index: {}]
  %s5 = inlined_call_operand.vmem [shape: bf16[64,1], index: 5, kind: input, shape index: {}]
  %s6 = inlined_call_operand.vmem [shape: f32[64,1], index: 6, kind: input, shape index: {}]
  %s7 = inlined_call_operand.<no memory space> [shape: f32[1,1], index: 7, kind: input, shape index: {}]
  %s8 = inlined_call_operand.vmem [shape: f32[1,256], index: 8, kind: output, shape index: {}]
  %s9 = sld [smem:[#allocation0]]
  $region106: #{simple_dnn_forward.1} parent=0
    _
  %s11 = ssub.s32 1, %s9
  %s12 = scalar_select 0, %s11, %s9
  %v13 = vstv %s7
  %14 = vst [vmem:[#allocation2] sm:$0x1] %v13
  $region1: #{simple_dnn_forward.1} parent=0
    #allocation3 [shape = 'u8[12288]{0}', space=vmem, size = 0x3000, scoped, tag = 'input window, operand 0']
    loop: start=0, step=1, limit=4
    $region2: #{simple_dnn_forward.1} parent=1 // loop_pre_header
      _
    $region3: #{simple_dnn_forward.1} parent=1 // loop_header
      %s16 = sphi 0, %s20
      %p17 = scmp.ge.s32.totalorder %s16, 4
      %s26 = sphi 0, %s28
      %s29 = sphi 0, %s26
      %s30 = sphi 0, %s29
      %s46 = sphi 0, %s30
      %s50 = sphi 0, %s50
      %s52 = sphi 0, %s50
      %s53 = sphi 0, %s52
      %s67 = sphi 0, %s53
      %s71 = sphi 0, %s71
      %s73 = sphi 0, %s71
      %s74 = sphi 0, %s73
      %s88 = sphi 0, %s74
      %s92 = sphi 0, %s92
      %s94 = sphi 0, %s92
      %s95 = sphi 0, %s94
      %s109 = sphi 0, %s95
      %s113 = sphi 0, %s113
      %s115 = sphi 0, %s113
      %s116 = sphi 0, %s115
      %s130 = sphi 0, %s116
      %s134 = sphi 0, %s134
      %s136 = sphi 0, %s134
      %s137 = sphi 0, %s136
      %s151 = sphi 0, %s137
      %s155 = sphi 0, %s155
      %s157 = sphi 0, %s155
      %s158 = sphi 0, %s157
      %s172 = sphi 0, %s158
      %s176 = sphi 0, %s176
      %s178 = sphi 0, %s176
      %s179 = sphi 0, %s178
      %s193 = sphi 0, %s179
      %s199 = sphi 0, %s201
      %s202 = sphi 0, %s199
      %s203 = sphi 0, %s202
      %s219 = sphi 0, %s203
    $region4: #{simple_dnn_forward.1} parent=1 // loop_header_branch
      %19 = sbr.rel (%p17) target = $region8
    $region5: #{simple_dnn_forward.1} parent=1 // loop_body
      %s21 = ssub.s32 %s16, 1
      %s22 = ssub.s32 %s16, 2
      %s23 = sadd.s32 %s16, 1
      %s24 = ssub.s32 %s16, %s23
      %p25 = scmp.eq.s32.totalorder %s24, 0
      %s27 = sadd.s32 %s26, 1
      %s28 = scalar_select %p25, %s26, %s27
      %p31 = pneg %p25
      %p32 = scmp.eq.s32.totalorder %s16, 1
      %p33 = por %p31, %p32
      %p34 = scmp.ne.s32.totalorder %s26, %s29
      %p35 = scmp.eq.s32.totalorder %s16, 0
      %p36 = por %p34, %p35
      %p37 = scmp.ne.s32.totalorder %s26, %s29
      %p38 = scmp.eq.s32.totalorder %s21, 1
      %p39 = por %p37, %p38
      %p40 = scmp.ne.s32.totalorder %s29, %s30
      %p41 = scmp.eq.s32.totalorder %s21, 0
      %p42 = por %p40, %p41
      %p43 = scmp.ne.s32.totalorder %s29, %s30
      %p44 = scmp.eq.s32.totalorder %s22, 1
      %p45 = por %p43, %p44
      %p47 = scmp.ne.s32.totalorder %s30, %s46
      %p48 = scmp.eq.s32.totalorder %s22, 0
      %p49 = por %p47, %p48
      %s51 = sadd.s32 %s50, 1
      %p54 = scmp.eq.s32.totalorder %s16, 1
      %p55 = scmp.ne.s32.totalorder %s50, %s52
      %p56 = scmp.eq.s32.totalorder %s16, 0
      %p57 = por %p55, %p56
      %p58 = scmp.ne.s32.totalorder %s50, %s52
      %p59 = scmp.eq.s32.totalorder %s21, 1
      %p60 = por %p58, %p59
      %p61 = scmp.ne.s32.totalorder %s52, %s53
      %p62 = scmp.eq.s32.totalorder %s21, 0
      %p63 = por %p61, %p62
      %p64 = scmp.ne.s32.totalorder %s52, %s53
      %p65 = scmp.eq.s32.totalorder %s22, 1
      %p66 = por %p64, %p65
      %p68 = scmp.ne.s32.totalorder %s53, %s67
      %p69 = scmp.eq.s32.totalorder %s22, 0
      %p70 = por %p68, %p69
      %s72 = sadd.s32 %s71, 1
      %p75 = scmp.eq.s32.totalorder %s16, 1
      %p76 = scmp.ne.s32.totalorder %s71, %s73
      %p77 = scmp.eq.s32.totalorder %s16, 0
      %p78 = por %p76, %p77
      %p79 = scmp.ne.s32.totalorder %s71, %s73
      %p80 = scmp.eq.s32.totalorder %s21, 1
      %p81 = por %p79, %p80
      %p82 = scmp.ne.s32.totalorder %s73, %s74
      %p83 = scmp.eq.s32.totalorder %s21, 0
      %p84 = por %p82, %p83
      %p85 = scmp.ne.s32.totalorder %s73, %s74
      %p86 = scmp.eq.s32.totalorder %s22, 1
      %p87 = por %p85, %p86
      %p89 = scmp.ne.s32.totalorder %s74, %s88
      %p90 = scmp.eq.s32.totalorder %s22, 0
      %p91 = por %p89, %p90
      %s93 = sadd.s32 %s92, 1
      %p96 = scmp.eq.s32.totalorder %s16, 1
      %p97 = scmp.ne.s32.totalorder %s92, %s94
      %p98 = scmp.eq.s32.totalorder %s16, 0
      %p99 = por %p97, %p98
      %p100 = scmp.ne.s32.totalorder %s92, %s94
      %p101 = scmp.eq.s32.totalorder %s21, 1
      %p102 = por %p100, %p101
      %p103 = scmp.ne.s32.totalorder %s94, %s95
      %p104 = scmp.eq.s32.totalorder %s21, 0
      %p105 = por %p103, %p104
      %p106 = scmp.ne.s32.totalorder %s94, %s95
      %p107 = scmp.eq.s32.totalorder %s22, 1
      %p108 = por %p106, %p107
      %p110 = scmp.ne.s32.totalorder %s95, %s109
      %p111 = scmp.eq.s32.totalorder %s22, 0
      %p112 = por %p110, %p111
      %s114 = sadd.s32 %s113, 1
      %p117 = scmp.eq.s32.totalorder %s16, 1
      %p118 = scmp.ne.s32.totalorder %s113, %s115
      %p119 = scmp.eq.s32.totalorder %s16, 0
      %p120 = por %p118, %p119
      %p121 = scmp.ne.s32.totalorder %s113, %s115
      %p122 = scmp.eq.s32.totalorder %s21, 1
      %p123 = por %p121, %p122
      %p124 = scmp.ne.s32.totalorder %s115, %s116
      %p125 = scmp.eq.s32.totalorder %s21, 0
      %p126 = por %p124, %p125
      %p127 = scmp.ne.s32.totalorder %s115, %s116
      %p128 = scmp.eq.s32.totalorder %s22, 1
      %p129 = por %p127, %p128
      %p131 = scmp.ne.s32.totalorder %s116, %s130
      %p132 = scmp.eq.s32.totalorder %s22, 0
      %p133 = por %p131, %p132
      %s135 = sadd.s32 %s134, 1
      %p138 = scmp.eq.s32.totalorder %s16, 1
      %p139 = scmp.ne.s32.totalorder %s134, %s136
      %p140 = scmp.eq.s32.totalorder %s16, 0
      %p141 = por %p139, %p140
      %p142 = scmp.ne.s32.totalorder %s134, %s136
      %p143 = scmp.eq.s32.totalorder %s21, 1
      %p144 = por %p142, %p143
      %p145 = scmp.ne.s32.totalorder %s136, %s137
      %p146 = scmp.eq.s32.totalorder %s21, 0
      %p147 = por %p145, %p146
      %p148 = scmp.ne.s32.totalorder %s136, %s137
      %p149 = scmp.eq.s32.totalorder %s22, 1
      %p150 = por %p148, %p149
      %p152 = scmp.ne.s32.totalorder %s137, %s151
      %p153 = scmp.eq.s32.totalorder %s22, 0
      %p154 = por %p152, %p153
      %s156 = sadd.s32 %s155, 1
      %p159 = scmp.eq.s32.totalorder %s16, 1
      %p160 = scmp.ne.s32.totalorder %s155, %s157
      %p161 = scmp.eq.s32.totalorder %s16, 0
      %p162 = por %p160, %p161
      %p163 = scmp.ne.s32.totalorder %s155, %s157
      %p164 = scmp.eq.s32.totalorder %s21, 1
      %p165 = por %p163, %p164
      %p166 = scmp.ne.s32.totalorder %s157, %s158
      %p167 = scmp.eq.s32.totalorder %s21, 0
      %p168 = por %p166, %p167
      %p169 = scmp.ne.s32.totalorder %s157, %s158
      %p170 = scmp.eq.s32.totalorder %s22, 1
      %p171 = por %p169, %p170
      %p173 = scmp.ne.s32.totalorder %s158, %s172
      %p174 = scmp.eq.s32.totalorder %s22, 0
      %p175 = por %p173, %p174
      %s177 = sadd.s32 %s176, 1
      %p180 = scmp.eq.s32.totalorder %s16, 1
      %p181 = scmp.ne.s32.totalorder %s176, %s178
      %p182 = scmp.eq.s32.totalorder %s16, 0
      %p183 = por %p181, %p182
      %p184 = scmp.ne.s32.totalorder %s176, %s178
      %p185 = scmp.eq.s32.totalorder %s21, 1
      %p186 = por %p184, %p185
      %p187 = scmp.ne.s32.totalorder %s178, %s179
      %p188 = scmp.eq.s32.totalorder %s21, 0
      %p189 = por %p187, %p188
      %p190 = scmp.ne.s32.totalorder %s178, %s179
      %p191 = scmp.eq.s32.totalorder %s22, 1
      %p192 = por %p190, %p191
      %p194 = scmp.ne.s32.totalorder %s179, %s193
      %p195 = scmp.eq.s32.totalorder %s22, 0
      %p196 = por %p194, %p195
      %s197 = ssub.s32 %s16, %s23
      %p198 = scmp.eq.s32.totalorder %s197, 0
      %s200 = sadd.s32 %s199, 1
      %s201 = scalar_select %p198, %s199, %s200
      %p204 = pneg %p198
      %p205 = scmp.eq.s32.totalorder %s16, 1
      %p206 = por %p204, %p205
      %p207 = scmp.ne.s32.totalorder %s199, %s202
      %p208 = scmp.eq.s32.totalorder %s16, 0
      %p209 = por %p207, %p208
      %p210 = scmp.ne.s32.totalorder %s199, %s202
      %p211 = scmp.eq.s32.totalorder %s21, 1
      %p212 = por %p210, %p211
      %p213 = scmp.ne.s32.totalorder %s202, %s203
      %p214 = scmp.eq.s32.totalorder %s21, 0
      %p215 = por %p213, %p214
      %p216 = scmp.ne.s32.totalorder %s202, %s203
      %p217 = scmp.eq.s32.totalorder %s22, 1
      %p218 = por %p216, %p217
      %p220 = scmp.ne.s32.totalorder %s203, %s219
      %p221 = scmp.eq.s32.totalorder %s22, 0
      %p222 = por %p220, %p221
      %p223 = scmp.le.s32.totalorder 1, %s16
      %p224 = scmp.lt.s32.totalorder %s16, 3
      %p225 = pnand %p223, %p224
      %p226 = pneg %p225
      // Predicated region
      $region9: #{simple_dnn_forward.1} parent=5 // pred_check
        _
      $region10: #{simple_dnn_forward.1} parent=5 // pred_check_branch
        %228 = sbr.rel (%p225) target = $region12
      $region11: #{simple_dnn_forward.1} parent=5 // pred_region
        %s229 = ssub.s32 %s16, 1
        // Predicated region
        $region13: #{simple_dnn_forward.1} parent=11 // pred_check
          %p230 = pneg %p63
        $region14: #{simple_dnn_forward.1} parent=11 // pred_check_branch
          %232 = sbr.rel (%p230) target = $region16
        $region15: #{simple_dnn_forward.1} parent=11 // pred_region
          _
        $region16: #{simple_dnn_forward.1} parent=11 // pred_fallthru
          _
        // Predicated region
        $region17: #{simple_dnn_forward.1} parent=11 // pred_check
          %p233 = pneg %p84
        $region18: #{simple_dnn_forward.1} parent=11 // pred_check_branch
          %235 = sbr.rel (%p233) target = $region20
        $region19: #{simple_dnn_forward.1} parent=11 // pred_region
          _
        $region20: #{simple_dnn_forward.1} parent=11 // pred_fallthru
          _
        // Predicated region
        $region21: #{simple_dnn_forward.1} parent=11 // pred_check
          %p236 = pneg %p105
        $region22: #{simple_dnn_forward.1} parent=11 // pred_check_branch
          %238 = sbr.rel (%p236) target = $region24
        $region23: #{simple_dnn_forward.1} parent=11 // pred_region
          _
        $region24: #{simple_dnn_forward.1} parent=11 // pred_fallthru
          _
        // Predicated region
        $region25: #{simple_dnn_forward.1} parent=11 // pred_check
          %p239 = pneg %p126
        $region26: #{simple_dnn_forward.1} parent=11 // pred_check_branch
          %241 = sbr.rel (%p239) target = $region28
        $region27: #{simple_dnn_forward.1} parent=11 // pred_region
          _
        $region28: #{simple_dnn_forward.1} parent=11 // pred_fallthru
          _
        // Predicated region
        $region29: #{simple_dnn_forward.1} parent=11 // pred_check
          %p242 = pneg %p147
        $region30: #{simple_dnn_forward.1} parent=11 // pred_check_branch
          %244 = sbr.rel (%p242) target = $region32
        $region31: #{simple_dnn_forward.1} parent=11 // pred_region
          _
        $region32: #{simple_dnn_forward.1} parent=11 // pred_fallthru
          _
        // Predicated region
        $region33: #{simple_dnn_forward.1} parent=11 // pred_check
          %p245 = pneg %p168
        $region34: #{simple_dnn_forward.1} parent=11 // pred_check_branch
          %247 = sbr.rel (%p245) target = $region36
        $region35: #{simple_dnn_forward.1} parent=11 // pred_region
          _
        $region36: #{simple_dnn_forward.1} parent=11 // pred_fallthru
          _
        // Predicated region
        $region37: #{simple_dnn_forward.1} parent=11 // pred_check
          %p248 = pneg %p189
        $region38: #{simple_dnn_forward.1} parent=11 // pred_check_branch
          %250 = sbr.rel (%p248) target = $region40
        $region39: #{simple_dnn_forward.1} parent=11 // pred_region
          _
        $region40: #{simple_dnn_forward.1} parent=11 // pred_fallthru
          _
      $region12: #{simple_dnn_forward.1} parent=5 // pred_fallthru
        _
      %p251 = scmp.lt.s32.totalorder %s16, 2
      // Predicated region
      $region41: #{simple_dnn_forward.1} parent=5 // pred_check
        %p252 = pneg %p251
      $region42: #{simple_dnn_forward.1} parent=5 // pred_check_branch
        %254 = sbr.rel (%p252) target = $region44
      $region43: #{simple_dnn_forward.1} parent=5 // pred_region
        // Predicated region
        $region45: #{simple_dnn_forward.1} parent=43 // pred_check
          %p255 = pneg %p36
        $region46: #{simple_dnn_forward.1} parent=43 // pred_check_branch
          %257 = sbr.rel (%p255) target = $region48
        $region47: #{simple_dnn_forward.1} parent=43 // pred_region
          %s258 = sand.u32 %s26, 1
          %s259 = sand.u32 %s26, 1
          %s260 = smul.addr %s259, 12
          %s261 = scalar_lea.vmem [#allocation3], %s260
          %s262 = smul.addr %s16, 4
          %s263 = scalar_lea.vmem %s0, %s262
          // Predicated region
          $region49: #{simple_dnn_forward.1} parent=47 // pred_check
            _
          $region50: #{simple_dnn_forward.1} parent=47 // pred_check_branch
            %265 = sbr.rel (0) target = $region52
          $region51: #{simple_dnn_forward.1} parent=47 // pred_region
            // Predicated region
            $region53: #{simple_dnn_forward.1} parent=51 // pred_check
              _
            $region54: #{simple_dnn_forward.1} parent=51 // pred_check_branch
              %267 = sbr.rel target = $region56
            $region55: #{simple_dnn_forward.1} parent=51 // pred_region
              // Predicated region
              $region68: #{simple_dnn_forward.1} parent=55 // pred_check
                _
              $region69: #{simple_dnn_forward.1} parent=55 // pred_check_branch
                %287 = sbr.rel (0) target = $region71
              $region70: #{simple_dnn_forward.1} parent=55 // pred_region
                loop: start=0, step=1, limit=1
                $region72: #{simple_dnn_forward.1} parent=70 // loop_pre_header
                  _
                $region73: #{simple_dnn_forward.1} parent=70 // loop_header
                  %s289 = sphi 0, %s293
                  %p290 = scmp.ge.s32.totalorder %s289, 1
                  %s294 = sphi %s263, %s263
                  %s295 = sphi %s261, %s261
                $region74: #{simple_dnn_forward.1} parent=70 // loop_header_branch
                  %292 = sbr.rel (%p290) target = $region78
                $region75: #{simple_dnn_forward.1} parent=70 // loop_body
                  _
                $region76: #{simple_dnn_forward.1} parent=70 // loop_footer
                  %s293 = sadd.s32 1, %s289
                $region77: #{simple_dnn_forward.1} parent=70 // loop_footer_branch
                  %288 = sbr.rel target = $region73
                $region78: #{simple_dnn_forward.1} parent=70 // loop_exit
                  _
                %s297 = ssub.s32 16, 1
                loop: start=0, step=1, limit=1
                $region79: #{simple_dnn_forward.1} parent=70 // loop_pre_header
                  _
                $region80: #{simple_dnn_forward.1} parent=70 // loop_header
                  %s299 = sphi 0, %s303
                  %p300 = scmp.ge.s32.totalorder %s299, 1
                  %s304 = sphi %s263, %s263
                  %s305 = sphi %s261, %s261
                $region81: #{simple_dnn_forward.1} parent=70 // loop_header_branch
                  %302 = sbr.rel (%p300) target = $region85
                $region82: #{simple_dnn_forward.1} parent=70 // loop_body
                  %v306 = vld [vmem:[%s304] sm:%s297]
                  %307 = vst [vmem:[%s305] sm:%s297] %v306
                  %v308 = vld [vmem:[%s304 + $0x8] sm:%s297]
                  %309 = vst [vmem:[%s305 + $0x4] sm:%s297] %v308
                  %v310 = vld [vmem:[%s304 + $0x10] sm:%s297]
                  %311 = vst [vmem:[%s305 + $0x8] sm:%s297] %v310
                $region83: #{simple_dnn_forward.1} parent=70 // loop_footer
                  %s303 = sadd.s32 1, %s299
                $region84: #{simple_dnn_forward.1} parent=70 // loop_footer_branch
                  %298 = sbr.rel target = $region80
                $region85: #{simple_dnn_forward.1} parent=70 // loop_exit
                  _
              $region71: #{simple_dnn_forward.1} parent=55 // pred_fallthru
                _
            $region56: #{simple_dnn_forward.1} parent=51 // pred_fallthru
              _
            // Predicated region
            $region57: #{simple_dnn_forward.1} parent=51 // pred_check
              _
            $region58: #{simple_dnn_forward.1} parent=51 // pred_check_branch
              %269 = sbr.rel (0) target = $region60
            $region59: #{simple_dnn_forward.1} parent=51 // pred_region
              %s271 = ssub.s32 16, 1
              loop: start=0, step=1, limit=1
              $region61: #{simple_dnn_forward.1} parent=59 // loop_pre_header
                _
              $region62: #{simple_dnn_forward.1} parent=59 // loop_header
                %s273 = sphi 0, %s277
                %p274 = scmp.ge.s32.totalorder %s273, 1
                %s278 = sphi %s263, %s263
                %s279 = sphi %s261, %s261
              $region63: #{simple_dnn_forward.1} parent=59 // loop_header_branch
                %276 = sbr.rel (%p274) target = $region67
              $region64: #{simple_dnn_forward.1} parent=59 // loop_body
                %v280 = vld [vmem:[%s278] sm:%s271]
                %281 = vst [vmem:[%s279] sm:%s271] %v280
                %v282 = vld [vmem:[%s278 + $0x8] sm:%s271]
                %283 = vst [vmem:[%s279 + $0x4] sm:%s271] %v282
                %v284 = vld [vmem:[%s278 + $0x10] sm:%s271]
                %285 = vst [vmem:[%s279 + $0x8] sm:%s271] %v284
              $region65: #{simple_dnn_forward.1} parent=59 // loop_footer
                %s277 = sadd.s32 1, %s273
              $region66: #{simple_dnn_forward.1} parent=59 // loop_footer_branch
                %272 = sbr.rel target = $region62
              $region67: #{simple_dnn_forward.1} parent=59 // loop_exit
                _
            $region60: #{simple_dnn_forward.1} parent=51 // pred_fallthru
              _
          $region52: #{simple_dnn_forward.1} parent=47 // pred_fallthru
            _
          %312 = vnop
        $region48: #{simple_dnn_forward.1} parent=43 // pred_fallthru
          _
      $region44: #{simple_dnn_forward.1} parent=5 // pred_fallthru
        _
      %p313 = scmp.le.s32.totalorder 1, %s16
      %p314 = scmp.lt.s32.totalorder %s16, 3
      %p315 = pnand %p313, %p314
      %p316 = pneg %p315
      // Predicated region
      $region86: #{simple_dnn_forward.1} parent=5 // pred_check
        _
      $region87: #{simple_dnn_forward.1} parent=5 // pred_check_branch
        %318 = sbr.rel (%p315) target = $region89
      $region88: #{simple_dnn_forward.1} parent=5 // pred_region
        %s319 = ssub.s32 %s16, 1
        %s320 = sand.u32 %s29, 1
        %s321 = sand.u32 %s29, 1
        %s322 = smul.addr %s321, 12
        %s323 = scalar_lea.vmem [#allocation3], %s322
        // Predicated region
        $region90: #{simple_dnn_forward.1} parent=88 // pred_check
          %p324 = pneg %p42
        $region91: #{simple_dnn_forward.1} parent=88 // pred_check_branch
          %326 = sbr.rel (%p324) target = $region93
        $region92: #{simple_dnn_forward.1} parent=88 // pred_region
          _
        $region93: #{simple_dnn_forward.1} parent=88 // pred_fallthru
          _
        %s327 = sand.u32 %s29, 1
        %s328 = sand.u32 %s29, 1
        %s329 = smul.addr %s328, 12
        %s330 = scalar_lea.vmem [#allocation3], %s329
        %p331 = pneg %p42
        %p332 = pneg %p39
        %p333 = pneg %p63
        %p334 = pneg %p60
        %p335 = pneg %p84
        %p336 = pneg %p81
        %p337 = pneg %p105
        %p338 = pneg %p102
        %p339 = pneg %p126
        %p340 = pneg %p123
        %p341 = pneg %p147
        %p342 = pneg %p144
        %p343 = pneg %p168
        %p344 = pneg %p165
        %p345 = pneg %p189
        %p346 = pneg %p186
        %p347 = pneg %p215
        %p348 = pneg %p212
        %p349 = scmp.lt.s32.totalorder %s21, 1
        %s350 = scalar_select %p349, %s21, 1
        %s351 = scalar_lea.vmem %s8, %s350
        %p352 = scmp.lt.s32.totalorder %s21, 1
        %s353 = scalar_select %p352, %s21, 1
        %s354 = scalar_lea.vmem %s8, %s353
        %v356 = vld [vmem:[%s323] sm:$0xf]
        %v357 = vld [vmem:[%s323 + $0x4] sm:$0xf]
        %v358 = vld [vmem:[%s323 + $0x8] sm:$0x1]
        %v359 = vld [vmem:[%s1] sm:$0xf]
        %v360 = vld [vmem:[%s1 + $0x4] sm:$0xf]
        %v361 = vld [vmem:[%s1 + $0x8] sm:$0xf]
        %v362 = vld [vmem:[%s1 + $0xc] sm:$0xf]
        %v363 = vld [vmem:[%s1 + $0x10] sm:$0xf]
        %v364 = vld [vmem:[%s1 + $0x14] sm:$0xf]
        %v365 = vld [vmem:[%s1 + $0x18] sm:$0xf]
        %v366 = vld [vmem:[%s1 + $0x1c] sm:$0xf]
        %v375 = vunpack.c.l.b16 %v359
        %v376 = vunpack.c.l.b16 %v360
        %v377 = vunpack.c.l.b16 %v361
        %v378 = vunpack.c.l.b16 %v362
        %v379 = vunpack.c.l.b16 %v363
        %v380 = vunpack.c.l.b16 %v364
        %v381 = vunpack.c.l.b16 %v365
        %v382 = vunpack.c.l.b16 %v366
        %v383 = vpack.c.b16 %v376, %v375
        %v384 = vpack.c.b16 %v378, %v377
        %v385 = vpack.c.b16 %v380, %v379
        %v386 = vpack.c.b16 %v382, %v381
        %v390 = vunpack.c.l.b16 %v356
        %v391 = vunpack.c.l.b16 %v357
        %v392 = vunpack.c.l.b16 %v358
        %v393 = vpack.c.b16 %v391, %v390
        %v394 = vpack.c.b16 %v392, %v392
        %vm396 = vcmask 146432
        %v398 = vsel %vm396, %v383, 0
        %v401 = vsel %vm396, %v384, 0
        %v404 = vsel %vm396, %v385, 0
        %v407 = vsel %vm396, %v386, 0
        %vm409 = vcmask 1040384
        %v411 = vsel %vm409, %v394, 0
        %413 = vmatpush.bf16.msra.mxu0 0
        %414 = vmatpush.bf16.msra.mxu0 0
        %415 = vmatpush.bf16.msra.mxu0 0
        %416 = vmatpush.bf16.msra.mxu0 0
        %417 = vmatpush.bf16.msra.mxu0 0
        %418 = vmatpush.bf16.msra.mxu0 0
        %419 = vmatpush.bf16.msra.mxu0 %v411
        %420 = vmatpush.bf16.msra.mxu0 %v393
        %421 = vmatmul.bf16.gmra.mxu0 %v398
        %v422 = vpop.f32.mrf.mxu0
        %v423 = vadd.f32 0.0, %v422
        %v424 = vpop.f32.mrf.mxu0
        %v425 = vadd.f32 0.0, %v424
        %426 = vmatmul.bf16.gmra.mxu0 %v401
        %v427 = vpop.f32.mrf.mxu0
        %v428 = vadd.f32 0.0, %v427
        %v429 = vpop.f32.mrf.mxu0
        %v430 = vadd.f32 0.0, %v429
        %431 = vmatmul.bf16.gmra.mxu0 %v404
        %v432 = vpop.f32.mrf.mxu0
        %v433 = vadd.f32 0.0, %v432
        %v434 = vpop.f32.mrf.mxu0
        %v435 = vadd.f32 0.0, %v434
        %436 = vmatmul.bf16.gmra.mxu0 %v407
        %v437 = vpop.f32.mrf.mxu0
        %v438 = vadd.f32 0.0, %v437
        %v439 = vpop.f32.mrf.mxu0
        %v440 = vadd.f32 0.0, %v439
        %441 = vdwg.mxu0
        %v442 = vmax.f32 %v423, 0.0
        %v443 = vmax.f32 %v425, 0.0
        %v444 = vmax.f32 %v428, 0.0
        %v445 = vmax.f32 %v430, 0.0
        %v446 = vmax.f32 %v433, 0.0
        %v447 = vmax.f32 %v435, 0.0
        %v448 = vmax.f32 %v438, 0.0
        %v449 = vmax.f32 %v440, 0.0
        %v450 = vpack.c.bf16 %v443, %v442
        %v451 = vpack.c.bf16 %v445, %v444
        %v452 = vpack.c.bf16 %v447, %v446
        %v453 = vpack.c.bf16 %v449, %v448
        %v454 = vld [vmem:[%s2] sm:$0xf]
        %v455 = vld [vmem:[%s2 + $0x4] sm:$0xf]
        %v456 = vld [vmem:[%s2 + $0x8] sm:$0xf]
        %v457 = vld [vmem:[%s2 + $0xc] sm:$0xf]
        %v458 = vld [vmem:[%s2 + $0x10] sm:$0xf]
        %v459 = vld [vmem:[%s2 + $0x14] sm:$0xf]
        %v460 = vld [vmem:[%s2 + $0x18] sm:$0xf]
        %v461 = vld [vmem:[%s2 + $0x1c] sm:$0xf]
        %v470 = vunpack.c.l.b16 %v454
        %v471 = vunpack.c.l.b16 %v455
        %v472 = vunpack.c.l.b16 %v456
        %v473 = vunpack.c.l.b16 %v457
        %v474 = vunpack.c.l.b16 %v458
        %v475 = vunpack.c.l.b16 %v459
        %v476 = vunpack.c.l.b16 %v460
        %v477 = vunpack.c.l.b16 %v461
        %v478 = vpack.c.b16 %v471, %v470
        %v479 = vpack.c.b16 %v473, %v472
        %v480 = vpack.c.b16 %v475, %v474
        %v481 = vpack.c.b16 %v477, %v476
        %vm482 = vcmask 523264
        %v484 = vsel %vm482, %v478, 0
        %v487 = vsel %vm482, %v479, 0
        %v490 = vsel %vm482, %v480, 0
        %v493 = vsel %vm482, %v481, 0
        %495 = vmatpush.bf16.msra.mxu0 0
        %496 = vmatpush.bf16.msra.mxu0 0
        %497 = vmatpush.bf16.msra.mxu0 0
        %498 = vmatpush.bf16.msra.mxu0 0
        %499 = vmatpush.bf16.msra.mxu0 %v453
        %500 = vmatpush.bf16.msra.mxu0 %v452
        %501 = vmatpush.bf16.msra.mxu0 %v451
        %502 = vmatpush.bf16.msra.mxu0 %v450
        %503 = vmatmul.bf16.gmra.mxu0 %v484
        %v504 = vpop.f32.mrf.mxu0
        %v505 = vadd.f32 0.0, %v504
        %v506 = vpop.f32.mrf.mxu0
        %v507 = vadd.f32 0.0, %v506
        %508 = vmatmul.bf16.gmra.mxu0 %v487
        %v509 = vpop.f32.mrf.mxu0
        %v510 = vadd.f32 0.0, %v509
        %v511 = vpop.f32.mrf.mxu0
        %v512 = vadd.f32 0.0, %v511
        %513 = vmatmul.bf16.gmra.mxu0 %v490
        %v514 = vpop.f32.mrf.mxu0
        %v515 = vadd.f32 0.0, %v514
        %v516 = vpop.f32.mrf.mxu0
        %v517 = vadd.f32 0.0, %v516
        %518 = vmatmul.bf16.gmra.mxu0 %v493
        %v519 = vpop.f32.mrf.mxu0
        %v520 = vadd.f32 0.0, %v519
        %v521 = vpop.f32.mrf.mxu0
        %v522 = vadd.f32 0.0, %v521
        %523 = vdwg.mxu0
        %v524 = vpack.c.bf16 %v505, %v505
        %v525 = vpack.c.bf16 %v507, %v507
        %v526 = vpack.c.bf16 %v510, %v510
        %v527 = vpack.c.bf16 %v512, %v512
        %v528 = vpack.c.bf16 %v515, %v515
        %v529 = vpack.c.bf16 %v517, %v517
        %v530 = vpack.c.bf16 %v520, %v520
        %v531 = vpack.c.bf16 %v522, %v522
        %v532 = vld [vmem:[%s3] sm:$0xf]
        %v533 = vld [vmem:[%s3 + $0x4] sm:$0xf]
        %v534 = vld [vmem:[%s3 + $0x8] sm:$0xf]
        %v535 = vld [vmem:[%s3 + $0xc] sm:$0xf]
        %v536 = vld [vmem:[%s3 + $0x10] sm:$0xf]
        %v537 = vld [vmem:[%s3 + $0x14] sm:$0xf]
        %v538 = vld [vmem:[%s3 + $0x18] sm:$0xf]
        %v539 = vld [vmem:[%s3 + $0x1c] sm:$0xf]
        %541 = vset.pattern.permute.xlu0 0
        %542 = vperm.xlu0 %541, %v532
        %v543 = vpop.permute.xlu0 %542
        %v546 = vunpack.c.l.s4 839922192
        %v547 = vunpack.c.0.s8 %v546
        %v548 = vperm.slane %v543, %v547
        %550 = vset.pattern.permute.xlu0 0
        %551 = vperm.xlu0 %550, %v533
        %v552 = vpop.permute.xlu0 %551
        %v555 = vunpack.c.l.s4 839922192
        %v556 = vunpack.c.0.s8 %v555
        %v557 = vperm.slane %v552, %v556
        %559 = vset.pattern.permute.xlu0 0
        %560 = vperm.xlu0 %559, %v534
        %v561 = vpop.permute.xlu0 %560
        %v564 = vunpack.c.l.s4 839922192
        %v565 = vunpack.c.0.s8 %v564
        %v566 = vperm.slane %v561, %v565
        %568 = vset.pattern.permute.xlu0 0
        %569 = vperm.xlu0 %568, %v535
        %v570 = vpop.permute.xlu0 %569
        %v573 = vunpack.c.l.s4 839922192
        %v574 = vunpack.c.0.s8 %v573
        %v575 = vperm.slane %v570, %v574
        %577 = vset.pattern.permute.xlu0 0
        %578 = vperm.xlu0 %577, %v536
        %v579 = vpop.permute.xlu0 %578
        %v582 = vunpack.c.l.s4 839922192
        %v583 = vunpack.c.0.s8 %v582
        %v584 = vperm.slane %v579, %v583
        %586 = vset.pattern.permute.xlu0 0
        %587 = vperm.xlu0 %586, %v537
        %v588 = vpop.permute.xlu0 %587
        %v591 = vunpack.c.l.s4 839922192
        %v592 = vunpack.c.0.s8 %v591
        %v593 = vperm.slane %v588, %v592
        %595 = vset.pattern.permute.xlu0 0
        %596 = vperm.xlu0 %595, %v538
        %v597 = vpop.permute.xlu0 %596
        %v600 = vunpack.c.l.s4 839922192
        %v601 = vunpack.c.0.s8 %v600
        %v602 = vperm.slane %v597, %v601
        %604 = vset.pattern.permute.xlu0 0
        %605 = vperm.xlu0 %604, %v539
        %v606 = vpop.permute.xlu0 %605
        %v609 = vunpack.c.l.s4 839922192
        %v610 = vunpack.c.0.s8 %v609
        %v611 = vperm.slane %v606, %v610
        %v612 = vunpack.c.l.bf16 %v524
        %v613 = vunpack.c.l.bf16 %v525
        %v614 = vunpack.c.l.bf16 %v526
        %v615 = vunpack.c.l.bf16 %v527
        %v616 = vunpack.c.l.bf16 %v528
        %v617 = vunpack.c.l.bf16 %v529
        %v618 = vunpack.c.l.bf16 %v530
        %v619 = vunpack.c.l.bf16 %v531
        %v620 = vunpack.c.l.bf16 %v548
        %v621 = vunpack.c.l.bf16 %v557
        %v622 = vunpack.c.l.bf16 %v566
        %v623 = vunpack.c.l.bf16 %v575
        %v624 = vunpack.c.l.bf16 %v584
        %v625 = vunpack.c.l.bf16 %v593
        %v626 = vunpack.c.l.bf16 %v602
        %v627 = vunpack.c.l.bf16 %v611
        %v628 = vadd.f32 %v612, %v620
        %v629 = vadd.f32 %v613, %v621
        %v630 = vadd.f32 %v614, %v622
        %v631 = vadd.f32 %v615, %v623
        %v632 = vadd.f32 %v616, %v624
        %v633 = vadd.f32 %v617, %v625
        %v634 = vadd.f32 %v618, %v626
        %v635 = vadd.f32 %v619, %v627
        %v636 = vpack.c.bf16 %v628, %v628
        %v637 = vpack.c.bf16 %v629, %v629
        %v638 = vpack.c.bf16 %v630, %v630
        %v639 = vpack.c.bf16 %v631, %v631
        %v640 = vpack.c.bf16 %v632, %v632
        %v641 = vpack.c.bf16 %v633, %v633
        %v642 = vpack.c.bf16 %v634, %v634
        %v643 = vpack.c.bf16 %v635, %v635
        %v644 = vunpack.c.l.bf16 %v636
        %v645 = vunpack.c.l.bf16 %v637
        %v646 = vunpack.c.l.bf16 %v638
        %v647 = vunpack.c.l.bf16 %v639
        %v648 = vunpack.c.l.bf16 %v640
        %v649 = vunpack.c.l.bf16 %v641
        %v650 = vunpack.c.l.bf16 %v642
        %v651 = vunpack.c.l.bf16 %v643
        %v652 = vmax.f32 %v644, 0.0
        %v653 = vmax.f32 %v645, 0.0
        %v654 = vmax.f32 %v646, 0.0
        %v655 = vmax.f32 %v647, 0.0
        %v656 = vmax.f32 %v648, 0.0
        %v657 = vmax.f32 %v649, 0.0
        %v658 = vmax.f32 %v650, 0.0
        %v659 = vmax.f32 %v651, 0.0
        %v660 = vpack.c.bf16 %v653, %v652
        %v661 = vpack.c.bf16 %v655, %v654
        %v662 = vpack.c.bf16 %v657, %v656
        %v663 = vpack.c.bf16 %v659, %v658
        %v664 = vld [vmem:[%s4] sm:$0xf]
        %v665 = vld [vmem:[%s4 + $0x4] sm:$0xf]
        %v666 = vld [vmem:[%s4 + $0x8] sm:$0xf]
        %v667 = vld [vmem:[%s4 + $0xc] sm:$0xf]
        %v668 = vld [vmem:[%s4 + $0x10] sm:$0xf]
        %v669 = vld [vmem:[%s4 + $0x14] sm:$0xf]
        %v670 = vld [vmem:[%s4 + $0x18] sm:$0xf]
        %v671 = vld [vmem:[%s4 + $0x1c] sm:$0xf]
        %v680 = vunpack.c.l.b16 %v664
        %v681 = vunpack.c.l.b16 %v665
        %v682 = vunpack.c.l.b16 %v666
        %v683 = vunpack.c.l.b16 %v667
        %v684 = vunpack.c.l.b16 %v668
        %v685 = vunpack.c.l.b16 %v669
        %v686 = vunpack.c.l.b16 %v670
        %v687 = vunpack.c.l.b16 %v671
        %v688 = vpack.c.b16 %v681, %v680
        %v689 = vpack.c.b16 %v683, %v682
        %v690 = vpack.c.b16 %v685, %v684
        %v691 = vpack.c.b16 %v687, %v686
        %v693 = vsel %vm482, %v688, 0
        %v696 = vsel %vm482, %v689, 0
        %v699 = vsel %vm482, %v690, 0
        %v702 = vsel %vm482, %v691, 0
        %704 = vmatpush.bf16.msra.mxu0 0
        %705 = vmatpush.bf16.msra.mxu0 0
        %706 = vmatpush.bf16.msra.mxu0 0
        %707 = vmatpush.bf16.msra.mxu0 0
        %708 = vmatpush.bf16.msra.mxu0 %v663
        %709 = vmatpush.bf16.msra.mxu0 %v662
        %710 = vmatpush.bf16.msra.mxu0 %v661
        %711 = vmatpush.bf16.msra.mxu0 %v660
        %712 = vmatmul.bf16.gmra.mxu0 %v693
        %v713 = vpop.f32.mrf.mxu0
        %v714 = vadd.f32 0.0, %v713
        %v715 = vpop.f32.mrf.mxu0
        %v716 = vadd.f32 0.0, %v715
        %717 = vmatmul.bf16.gmra.mxu0 %v696
        %v718 = vpop.f32.mrf.mxu0
        %v719 = vadd.f32 0.0, %v718
        %v720 = vpop.f32.mrf.mxu0
        %v721 = vadd.f32 0.0, %v720
        %722 = vmatmul.bf16.gmra.mxu0 %v699
        %v723 = vpop.f32.mrf.mxu0
        %v724 = vadd.f32 0.0, %v723
        %v725 = vpop.f32.mrf.mxu0
        %v726 = vadd.f32 0.0, %v725
        %727 = vmatmul.bf16.gmra.mxu0 %v702
        %v728 = vpop.f32.mrf.mxu0
        %v729 = vadd.f32 0.0, %v728
        %v730 = vpop.f32.mrf.mxu0
        %v731 = vadd.f32 0.0, %v730
        %732 = vdwg.mxu0
        %v733 = vpack.c.bf16 %v714, %v714
        %v734 = vpack.c.bf16 %v716, %v716
        %v735 = vpack.c.bf16 %v719, %v719
        %v736 = vpack.c.bf16 %v721, %v721
        %v737 = vpack.c.bf16 %v724, %v724
        %v738 = vpack.c.bf16 %v726, %v726
        %v739 = vpack.c.bf16 %v729, %v729
        %v740 = vpack.c.bf16 %v731, %v731
        %v741 = vld [vmem:[%s5] sm:$0xf]
        %v742 = vld [vmem:[%s5 + $0x4] sm:$0xf]
        %v743 = vld [vmem:[%s5 + $0x8] sm:$0xf]
        %v744 = vld [vmem:[%s5 + $0xc] sm:$0xf]
        %v745 = vld [vmem:[%s5 + $0x10] sm:$0xf]
        %v746 = vld [vmem:[%s5 + $0x14] sm:$0xf]
        %v747 = vld [vmem:[%s5 + $0x18] sm:$0xf]
        %v748 = vld [vmem:[%s5 + $0x1c] sm:$0xf]
        %750 = vset.pattern.permute.xlu0 0
        %751 = vperm.xlu0 %750, %v741
        %v752 = vpop.permute.xlu0 %751
        %v755 = vunpack.c.l.s4 839922192
        %v756 = vunpack.c.0.s8 %v755
        %v757 = vperm.slane %v752, %v756
        %759 = vset.pattern.permute.xlu0 0
        %760 = vperm.xlu0 %759, %v742
        %v761 = vpop.permute.xlu0 %760
        %v764 = vunpack.c.l.s4 839922192
        %v765 = vunpack.c.0.s8 %v764
        %v766 = vperm.slane %v761, %v765
        %768 = vset.pattern.permute.xlu0 0
        %769 = vperm.xlu0 %768, %v743
        %v770 = vpop.permute.xlu0 %769
        %v773 = vunpack.c.l.s4 839922192
        %v774 = vunpack.c.0.s8 %v773
        %v775 = vperm.slane %v770, %v774
        %777 = vset.pattern.permute.xlu0 0
        %778 = vperm.xlu0 %777, %v744
        %v779 = vpop.permute.xlu0 %778
        %v782 = vunpack.c.l.s4 839922192
        %v783 = vunpack.c.0.s8 %v782
        %v784 = vperm.slane %v779, %v783
        %786 = vset.pattern.permute.xlu0 0
        %787 = vperm.xlu0 %786, %v745
        %v788 = vpop.permute.xlu0 %787
        %v791 = vunpack.c.l.s4 839922192
        %v792 = vunpack.c.0.s8 %v791
        %v793 = vperm.slane %v788, %v792
        %795 = vset.pattern.permute.xlu0 0
        %796 = vperm.xlu0 %795, %v746
        %v797 = vpop.permute.xlu0 %796
        %v800 = vunpack.c.l.s4 839922192
        %v801 = vunpack.c.0.s8 %v800
        %v802 = vperm.slane %v797, %v801
        %804 = vset.pattern.permute.xlu0 0
        %805 = vperm.xlu0 %804, %v747
        %v806 = vpop.permute.xlu0 %805
        %v809 = vunpack.c.l.s4 839922192
        %v810 = vunpack.c.0.s8 %v809
        %v811 = vperm.slane %v806, %v810
        %813 = vset.pattern.permute.xlu0 0
        %814 = vperm.xlu0 %813, %v748
        %v815 = vpop.permute.xlu0 %814
        %v818 = vunpack.c.l.s4 839922192
        %v819 = vunpack.c.0.s8 %v818
        %v820 = vperm.slane %v815, %v819
        %v821 = vunpack.c.l.bf16 %v733
        %v822 = vunpack.c.l.bf16 %v734
        %v823 = vunpack.c.l.bf16 %v735
        %v824 = vunpack.c.l.bf16 %v736
        %v825 = vunpack.c.l.bf16 %v737
        %v826 = vunpack.c.l.bf16 %v738
        %v827 = vunpack.c.l.bf16 %v739
        %v828 = vunpack.c.l.bf16 %v740
        %v829 = vunpack.c.l.bf16 %v757
        %v830 = vunpack.c.l.bf16 %v766
        %v831 = vunpack.c.l.bf16 %v775
        %v832 = vunpack.c.l.bf16 %v784
        %v833 = vunpack.c.l.bf16 %v793
        %v834 = vunpack.c.l.bf16 %v802
        %v835 = vunpack.c.l.bf16 %v811
        %v836 = vunpack.c.l.bf16 %v820
        %v837 = vadd.f32 %v821, %v829
        %v838 = vadd.f32 %v822, %v830
        %v839 = vadd.f32 %v823, %v831
        %v840 = vadd.f32 %v824, %v832
        %v841 = vadd.f32 %v825, %v833
        %v842 = vadd.f32 %v826, %v834
        %v843 = vadd.f32 %v827, %v835
        %v844 = vadd.f32 %v828, %v836
        %v845 = vpack.c.bf16 %v837, %v837
        %v846 = vpack.c.bf16 %v838, %v838
        %v847 = vpack.c.bf16 %v839, %v839
        %v848 = vpack.c.bf16 %v840, %v840
        %v849 = vpack.c.bf16 %v841, %v841
        %v850 = vpack.c.bf16 %v842, %v842
        %v851 = vpack.c.bf16 %v843, %v843
        %v852 = vpack.c.bf16 %v844, %v844
        %v853 = vunpack.c.l.bf16 %v845
        %v854 = vunpack.c.l.bf16 %v846
        %v855 = vunpack.c.l.bf16 %v847
        %v856 = vunpack.c.l.bf16 %v848
        %v857 = vunpack.c.l.bf16 %v849
        %v858 = vunpack.c.l.bf16 %v850
        %v859 = vunpack.c.l.bf16 %v851
        %v860 = vunpack.c.l.bf16 %v852
        %v861 = vmax.f32 %v853, 0.0
        %v862 = vmax.f32 %v854, 0.0
        %v863 = vmax.f32 %v855, 0.0
        %v864 = vmax.f32 %v856, 0.0
        %v865 = vmax.f32 %v857, 0.0
        %v866 = vmax.f32 %v858, 0.0
        %v867 = vmax.f32 %v859, 0.0
        %v868 = vmax.f32 %v860, 0.0
        %v869 = vpack.c.bf16 %v861, %v861
        %v870 = vpack.c.bf16 %v862, %v862
        %v871 = vpack.c.bf16 %v863, %v863
        %v872 = vpack.c.bf16 %v864, %v864
        %v873 = vpack.c.bf16 %v865, %v865
        %v874 = vpack.c.bf16 %v866, %v866
        %v875 = vpack.c.bf16 %v867, %v867
        %v876 = vpack.c.bf16 %v868, %v868
        %v877 = vld [vmem:[%s6] sm:$0xff]
        %v878 = vld [vmem:[%s6 + $0x8] sm:$0xff]
        %v879 = vld [vmem:[%s6 + $0x10] sm:$0xff]
        %v880 = vld [vmem:[%s6 + $0x18] sm:$0xff]
        %v881 = vld [vmem:[%s6 + $0x20] sm:$0xff]
        %v882 = vld [vmem:[%s6 + $0x28] sm:$0xff]
        %v883 = vld [vmem:[%s6 + $0x30] sm:$0xff]
        %v884 = vld [vmem:[%s6 + $0x38] sm:$0xff]
        %v885 = vunpack.c.l.bf16 %v869
        %v886 = vunpack.c.l.bf16 %v870
        %v887 = vunpack.c.l.bf16 %v871
        %v888 = vunpack.c.l.bf16 %v872
        %v889 = vunpack.c.l.bf16 %v873
        %v890 = vunpack.c.l.bf16 %v874
        %v891 = vunpack.c.l.bf16 %v875
        %v892 = vunpack.c.l.bf16 %v876
        %894 = vset.pattern.permute.xlu0 0
        %895 = vperm.xlu0 %894, %v877
        %v896 = vpop.permute.xlu0 %895
        %899 = vset.pattern.permute.xlu0 0
        %900 = vperm.xlu0 %899, %v878
        %v901 = vpop.permute.xlu0 %900
        %904 = vset.pattern.permute.xlu0 0
        %905 = vperm.xlu0 %904, %v879
        %v906 = vpop.permute.xlu0 %905
        %909 = vset.pattern.permute.xlu0 0
        %910 = vperm.xlu0 %909, %v880
        %v911 = vpop.permute.xlu0 %910
        %914 = vset.pattern.permute.xlu0 0
        %915 = vperm.xlu0 %914, %v881
        %v916 = vpop.permute.xlu0 %915
        %919 = vset.pattern.permute.xlu0 0
        %920 = vperm.xlu0 %919, %v882
        %v921 = vpop.permute.xlu0 %920
        %924 = vset.pattern.permute.xlu0 0
        %925 = vperm.xlu0 %924, %v883
        %v926 = vpop.permute.xlu0 %925
        %929 = vset.pattern.permute.xlu0 0
        %930 = vperm.xlu0 %929, %v884
        %v931 = vpop.permute.xlu0 %930
        %v933 = vmul.f32 %v896, %v885
        %v934 = vmul.f32 %v901, %v886
        %v935 = vmul.f32 %v906, %v887
        %v936 = vmul.f32 %v911, %v888
        %v937 = vmul.f32 %v916, %v889
        %v938 = vmul.f32 %v921, %v890
        %v939 = vmul.f32 %v926, %v891
        %v940 = vmul.f32 %v931, %v892
        %v941 = vadd.f32 %v933, %v934
        %v942 = vadd.f32 %v941, %v935
        %v943 = vadd.f32 %v942, %v936
        %v944 = vadd.f32 %v943, %v937
        %v945 = vadd.f32 %v944, %v938
        %v946 = vadd.f32 %v945, %v939
        %v947 = vadd.f32 %v946, %v940
        %v948 = vrot.slane %v947, 4
        %v949 = vadd.f32 %v947, %v948
        %v950 = vrot.slane %v949, 2
        %v951 = vadd.f32 %v949, %v950
        %v952 = vrot.slane %v951, 1
        %v953 = vadd.f32 %v951, %v952
        %v954 = vld [vmem:[#allocation2] sm:$0x1]
        %956 = vset.pattern.permute.xlu0 0
        %957 = vperm.xlu0 %956, %v954
        %v958 = vpop.permute.xlu0 %957
        %v960 = vperm.slane %v958, 0
        %v961 = vadd.f32 %v953, %v960
        %962 = vst [vmem:[%s354] sm:$0x1] %v961
        %p963 = scmp.lt.s32.totalorder %s21, 1
        %s964 = scalar_select %p963, %s21, 1
        %s965 = scalar_lea.vmem %s8, %s964
        // Predicated region
        $region94: #{simple_dnn_forward.1} parent=88 // pred_check
          %p966 = pneg %p212
        $region95: #{simple_dnn_forward.1} parent=88 // pred_check_branch
          %968 = sbr.rel (%p966) target = $region97
        $region96: #{simple_dnn_forward.1} parent=88 // pred_region
          _
        $region97: #{simple_dnn_forward.1} parent=88 // pred_fallthru
          _
      $region89: #{simple_dnn_forward.1} parent=5 // pred_fallthru
        _
      %p969 = scmp.le.s32.totalorder 2, %s16
      // Predicated region
      $region98: #{simple_dnn_forward.1} parent=5 // pred_check
        %p970 = pneg %p969
      $region99: #{simple_dnn_forward.1} parent=5 // pred_check_branch
        %972 = sbr.rel (%p970) target = $region101
      $region100: #{simple_dnn_forward.1} parent=5 // pred_region
        %s973 = ssub.s32 %s16, 2
        // Predicated region
        $region102: #{simple_dnn_forward.1} parent=100 // pred_check
          %p974 = pneg %p218
        $region103: #{simple_dnn_forward.1} parent=100 // pred_check_branch
          %976 = sbr.rel (%p974) target = $region105
        $region104: #{simple_dnn_forward.1} parent=100 // pred_region
          %p977 = scmp.lt.s32.totalorder %s22, 1
          %s978 = scalar_select %p977, %s22, 1
          %s979 = scalar_lea.vmem %s8, %s978
        $region105: #{simple_dnn_forward.1} parent=100 // pred_fallthru
          _
      $region101: #{simple_dnn_forward.1} parent=5 // pred_fallthru
        _
    $region6: #{simple_dnn_forward.1} parent=1 // loop_footer
      %s20 = sadd.s32 1, %s16
    $region7: #{simple_dnn_forward.1} parent=1 // loop_footer_branch
      %15 = sbr.rel target = $region3
    $region8: #{simple_dnn_forward.1} parent=1 // loop_exit
      _

</llo_original>
